<compile_context>
chip_gen: v7x
topology: tpu7x:2x2x1
jax: 0.10.0
libtpu: 0.0.40
codegen_flags: <defaults>
</compile_context>

<pallas_src>
import functools

import jax
import jax.numpy as jnp
from jax.experimental import pallas as pl
from jax.experimental.pallas import tpu as pltpu


_LANES = 128
_SUBLANES = 8


def _round_up(x, m):
    return ((x + m - 1) // m) * m


def _cdiv(a, b):
    return -(-a // b)


def _tpu_defaults():
    """(n_splits, block_rows_target) chosen per TPU generation."""
    try:
        kind = jax.devices()[0].device_kind.lower()
    except Exception:
        kind = ""
    if "v7" in kind or "7x" in kind:
        # 2 TensorCores/chip; larger tiles amortize the ~0.35us/step grid
        # overhead against ~3.2 TB/s per-TC HBM bandwidth.
        return 2, 4096
    if "v6" in kind:
        return 1, 2048
    # v5e / unknown: single TensorCore; ~1024 rows is already near roofline.
    return 1, 1024


def _mse_partial_kernel(x_ref, t_ref, out_ref, acc_ref, *,
                        blocks_per_core, total_blocks, block_rows, tail_rows):
    """Accumulates sum((x - t)^2) over this core's slice of the flattened data.

    grid = (n_splits, blocks_per_core); axis 0 is "parallel" (per-TensorCore
    partial sums), axis 1 is the streaming reduction axis.
    """
    c = pl.program_id(0)
    i = pl.program_id(1)
    blk = c * blocks_per_core + i          # global block index (may overshoot)

    @pl.when(i == 0)
    def _init():
        acc_ref[...] = jnp.zeros_like(acc_ref)

    def accumulate(masked):
        x = x_ref[...]
        t = t_ref[...]
        # Accumulate in f32. Narrower dtypes are upcast here (HBM traffic stays
        # narrow); f64 (only with x64 enabled) is downcast to f32 on purpose.
        if x.dtype != jnp.float32:
            x = x.astype(jnp.float32)
            t = t.astype(jnp.float32)
        d = x - t
        dd = d * d
        if masked:
            # The last real block overhangs the array: local rows >= tail_rows
            # hold stale VMEM contents -> mask them out (select, no NaN prop).
            row_ids = jax.lax.broadcasted_iota(jnp.int32, (block_rows, _LANES), 0)
            dd = jnp.where(row_ids < tail_rows, dd, 0.0)
        # Fold (block_rows, 128) -> (8, 128): the reshape stays on (8,128) tile
        # boundaries (free) and the axis-0 sum is cross-vreg VPU adds (no XLU),
        # so the live accumulator is one vreg-group instead of a full tile.
        folded = dd.reshape(block_rows // _SUBLANES, _SUBLANES, _LANES).sum(axis=0)
        acc_ref[...] += folded

    if tail_rows == 0:
        # Every real block is full; only (possible) dummy tail steps are skipped.
        @pl.when(blk < total_blocks)
        def _():
            accumulate(masked=False)
    else:
        @pl.when(blk < total_blocks - 1)
        def _():
            accumulate(masked=False)

        @pl.when(blk == total_blocks - 1)
        def _():
            accumulate(masked=True)

    @pl.when(i == pl.num_programs(1) - 1)
    def _finalize():
        # Lane-dense (8,128) partial-sum slab per core; the wrapper does the
        # tiny final reduce + divide.
        out_ref[0] = acc_ref[...]


def content_loss_forward(x, target):
    """Mirrors ContentLoss.forward: returns (input passthrough, scalar MSE loss)."""
    assert x.shape == target.shape, "input and target must match"
    assert x.dtype == target.dtype, "input and target dtypes must match"
    n = x.size
    itemsize = jnp.dtype(x.dtype).itemsize
    # Sub-32-bit dtypes pack along sublanes: min second-to-last block dim.
    sublane_mult = max(_SUBLANES, 32 // max(itemsize, 1))

    n_splits, block_rows_target = _tpu_defaults()

    # Flatten (free for contiguous arrays). Pad ONLY when unavoidable:
    #  * n not a multiple of 128 (cannot form a lane-dense (rows,128) view), or
    #  * fewer rows than one packed sublane group (tiny inputs).
    # Padded elements are zeros -> (0-0)^2 contributes nothing to the sum.
    # TODO(synk): a fully copy-free ragged path would need manual DMA of the
    # sub-128-element remainder; not worth it for so few elements.
    xf = x.reshape(-1)
    tf = target.reshape(-1)
    n_pad = max(_round_up(n, _LANES), sublane_mult * _LANES)
    if n_pad != n:
        xf = jnp.pad(xf, (0, n_pad - n))
        tf = jnp.pad(tf, (0, n_pad - n))
    rows = n_pad // _LANES
    xf = xf.reshape(rows, _LANES)
    tf = tf.reshape(rows, _LANES)

    # Largest block that (a) respects the packed-sublane multiple, (b) never
    # exceeds the array extent, (c) fits comfortably in VMEM.
    block_rows = min(block_rows_target, (rows // sublane_mult) * sublane_mult)
    total_blocks = _cdiv(rows, block_rows)
    n_splits = min(n_splits, total_blocks)
    blocks_per_core = _cdiv(total_blocks, n_splits)
    tail_rows = rows % block_rows        # valid rows in the last block (0 = full)

    # Dummy steps (only when total_blocks is odd and n_splits == 2) re-point at
    # the last real block (same block index -> no extra DMA) and are skipped
    # inside the kernel.
    def in_map(c, i):
        return (jnp.minimum(c * blocks_per_core + i, total_blocks - 1), 0)

    kernel = functools.partial(
        _mse_partial_kernel,
        blocks_per_core=blocks_per_core,
        total_blocks=total_blocks,
        block_rows=block_rows,
        tail_rows=tail_rows,
    )

    # 2 inputs x double-buffer + small accumulator/output slabs, with headroom.
    in_tile_bytes = block_rows * _LANES * itemsize
    vmem_limit = int(min(max(4 * in_tile_bytes + (1 << 20), 16 << 20), 32 << 20))

    partials = pl.pallas_call(
        kernel,
        out_shape=jax.ShapeDtypeStruct((n_splits, _SUBLANES, _LANES), jnp.float32),
        grid_spec=pltpu.PrefetchScalarGridSpec(
            num_scalar_prefetch=0,
            grid=(n_splits, blocks_per_core),
            in_specs=[
                pl.BlockSpec((block_rows, _LANES), in_map),
                pl.BlockSpec((block_rows, _LANES), in_map),
            ],
            out_specs=pl.BlockSpec((1, _SUBLANES, _LANES), lambda c, i: (c, 0, 0)),
            scratch_shapes=[pltpu.VMEM((_SUBLANES, _LANES), jnp.float32)],
        ),
        compiler_params=pltpu.CompilerParams(
            dimension_semantics=("parallel", "arbitrary"),
            vmem_limit_bytes=vmem_limit,
        ),
    )(xf, tf)

    loss = jnp.sum(partials) / n
    # forward() returns the input unchanged (passthrough); loss is a side value.
    return x, loss


if __name__ == "__main__":
    key = jax.random.PRNGKey(0)

    def run_case(k, shape, dtype=jnp.float32, rtol=1e-5, atol=1e-6):
        kx, kt = jax.random.split(k)
        x = jax.random.normal(kx, shape, dtype=jnp.float32).astype(dtype)
        # "target" is the fixed (detached) tensor supplied at construction.
        target = jax.random.normal(kt, shape, dtype=jnp.float32).astype(dtype)
        out, loss = content_loss_forward(x, target)
        out = jax.block_until_ready(out)
        loss = jax.block_until_ready(loss)
        ref_loss = jnp.mean(
            (x.astype(jnp.float32) - target.astype(jnp.float32)) ** 2)
        assert jnp.allclose(loss, ref_loss, rtol=rtol, atol=atol), (
            shape, dtype, loss, ref_loss)
        assert out.shape == x.shape and out.dtype == x.dtype
        assert bool(jnp.all(out == x))

    k1, k2, k3, k4 = jax.random.split(key, 4)
    # Small NCHW feature map (module-spec scale), exact multiple of 128: zero-copy path.
    run_case(k1, (2, 4, 16, 16))
    # Ragged shape: exercises the minimal sub-128 pad + masked last block.
    run_case(k2, (2, 3, 15, 17))
    # Larger map: multi-block streaming accumulation + masked last block, zero-copy.
    run_case(k3, (1, 3, 224, 224))
    # bf16 inputs: packed-sublane block rounding + in-kernel upcast.
    run_case(k4, (2, 4, 16, 16), dtype=jnp.bfloat16, rtol=1e-4, atol=1e-5)

    print("KERNEL_OK")
</pallas_src>

<mosaic_0001>
module attributes {stable_mosaic.version = 11 : i64} {
  func.func @_mse_partial_kernel(%arg0: i32, %arg1: i32, %arg2: memref<16x128xf32, #tpu.memory_space<vmem>>, %arg3: memref<16x128xf32, #tpu.memory_space<vmem>>, %arg4: memref<1x8x128xf32, #tpu.memory_space<vmem>>, %arg5: memref<8x128xf32, #tpu.memory_space<vmem>>) attributes {dimension_semantics = [#tpu.dimension_semantics<parallel>, #tpu.dimension_semantics<arbitrary>], iteration_bounds = array<i64: 1, 1>, scalar_prefetch = 0 : i64, scratch_operands = 1 : i64, tpu.core_type = #tpu.core_type<tc>, window_params = [{transform_indices = @transform_0, window_bounds = array<i64: 16, 128>}, {transform_indices = @transform_1, window_bounds = array<i64: 16, 128>}, {transform_indices = @transform_2, window_bounds = array<i64: 1, 8, 128>}]} {
    %c1_i32 = arith.constant 1 : i32
    %0 = arith.muli %arg0, %c1_i32 : i32
    %1 = arith.addi %0, %arg1 : i32
    %c0_i32 = arith.constant 0 : i32
    %2 = arith.cmpi eq, %arg1, %c0_i32 : i32
    %3 = arith.extui %2 : i1 to i32
    %c0_i32_0 = arith.constant 0 : i32
    %4 = arith.cmpi ne, %3, %c0_i32_0 : i32
    scf.if %4 {
      %cst = arith.constant 0.000000e+00 : f32
      %11 = vector.broadcast %cst : f32 to vector<8x128xf32>
      %c0 = arith.constant 0 : index
      %c0_5 = arith.constant 0 : index
      %12 = vector.load %arg5[%c0, %c0_5] : memref<8x128xf32, #tpu.memory_space<vmem>>, vector<8x128xf32>
      tpu.vector_store %arg5[%c0, %c0_5], %11 {strides = array<i32>} : memref<8x128xf32, #tpu.memory_space<vmem>>, vector<8x128xf32>,
    } else {
    }
    %c1_i32_1 = arith.constant 1 : i32
    %5 = arith.cmpi slt, %1, %c1_i32_1 : i32
    %6 = arith.extui %5 : i1 to i32
    %c0_i32_2 = arith.constant 0 : i32
    %7 = arith.cmpi ne, %6, %c0_i32_2 : i32
    scf.if %7 {
      %c0 = arith.constant 0 : index
      %c0_5 = arith.constant 0 : index
      %11 = vector.load %arg2[%c0, %c0_5] : memref<16x128xf32, #tpu.memory_space<vmem>>, vector<16x128xf32>
      %c0_6 = arith.constant 0 : index
      %c0_7 = arith.constant 0 : index
      %12 = vector.load %arg3[%c0_6, %c0_7] : memref<16x128xf32, #tpu.memory_space<vmem>>, vector<16x128xf32>
      %13 = arith.subf %11, %12 : vector<16x128xf32>
      %14 = arith.mulf %13, %13 : vector<16x128xf32>
      %15 = vector.shape_cast %14 : vector<16x128xf32> to vector<2x8x128xf32>
      %cst = arith.constant dense<0.000000e+00> : vector<8x128xf32>
      %16 = vector.multi_reduction <add>, %15, %cst [0] : vector<2x8x128xf32> to vector<8x128xf32>
      %c0_8 = arith.constant 0 : index
      %c0_9 = arith.constant 0 : index
      %17 = vector.load %arg5[%c0_8, %c0_9] : memref<8x128xf32, #tpu.memory_space<vmem>>, vector<8x128xf32>
      %18 = arith.addf %17, %16 : vector<8x128xf32>
      %c0_10 = arith.constant 0 : index
      %c0_11 = arith.constant 0 : index
      %19 = vector.load %arg5[%c0_10, %c0_11] : memref<8x128xf32, #tpu.memory_space<vmem>>, vector<8x128xf32>
      tpu.vector_store %arg5[%c0_10, %c0_11], %18 {strides = array<i32>} : memref<8x128xf32, #tpu.memory_space<vmem>>, vector<8x128xf32>,
    } else {
    }
    %c0_i32_3 = arith.constant 0 : i32
    %8 = arith.cmpi eq, %arg1, %c0_i32_3 : i32
    %9 = arith.extui %8 : i1 to i32
    %c0_i32_4 = arith.constant 0 : i32
    %10 = arith.cmpi ne, %9, %c0_i32_4 : i32
    scf.if %10 {
      %c0 = arith.constant 0 : index
      %c0_5 = arith.constant 0 : index
      %11 = vector.load %arg5[%c0, %c0_5] : memref<8x128xf32, #tpu.memory_space<vmem>>, vector<8x128xf32>
      %c0_6 = arith.constant 0 : index
      %c0_7 = arith.constant 0 : index
      %c0_8 = arith.constant 0 : index
      %12 = vector.load %arg4[%c0_6, %c0_7, %c0_8] : memref<1x8x128xf32, #tpu.memory_space<vmem>>, vector<1x8x128xf32>
      %13 = vector.shape_cast %12 : vector<1x8x128xf32> to vector<8x128xf32>
      %14 = vector.shape_cast %11 : vector<8x128xf32> to vector<1x8x128xf32>
      tpu.vector_store %arg4[%c0_6, %c0_7, %c0_8], %14 {strides = array<i32>} : memref<1x8x128xf32, #tpu.memory_space<vmem>>, vector<1x8x128xf32>,
    } else {
    }
    return
  }
  func.func @transform_0(%arg0: i32, %arg1: i32) -> (i32, i32) {
    %c1_i32 = arith.constant 1 : i32
    %0 = arith.muli %arg0, %c1_i32 : i32
    %1 = arith.addi %0, %arg1 : i32
    %c0_i32 = arith.constant 0 : i32
    %2 = arith.minsi %1, %c0_i32 : i32
    %c0_i32_0 = arith.constant 0 : i32
    %c0_i32_1 = arith.constant 0 : i32
    return %2, %c0_i32_0 : i32, i32
  }
  func.func @transform_1(%arg0: i32, %arg1: i32) -> (i32, i32) {
    %c1_i32 = arith.constant 1 : i32
    %0 = arith.muli %arg0, %c1_i32 : i32
    %1 = arith.addi %0, %arg1 : i32
    %c0_i32 = arith.constant 0 : i32
    %2 = arith.minsi %1, %c0_i32 : i32
    %c0_i32_0 = arith.constant 0 : i32
    %c0_i32_1 = arith.constant 0 : i32
    return %2, %c0_i32_0 : i32, i32
  }
  func.func @transform_2(%arg0: i32, %arg1: i32) -> (i32, i32, i32) {
    %c0_i32 = arith.constant 0 : i32
    %c0_i32_0 = arith.constant 0 : i32
    %c0_i32_1 = arith.constant 0 : i32
    return %arg0, %c0_i32, %c0_i32_0 : i32, i32, i32
  }
}

</mosaic_0001>

<llo_original>
// kernel: tpu_custom_call.1
$region0: #{tpu_custom_call.1}
  #allocation0 [shape = 'u32[]', space=smem, size = 0x4, offset = 0x4, fixed_abs, tag = 'smem constant byte address 0x4 - core index']
  #allocation1 [shape = 'u32[144,128]{1,0:T(1,128)}', space=vmem, size = 0x12000, scoped, tag = 'internal scratch']
  #allocation2 [shape = 'f32[8,128]{1,0:T(8,128)}', space=vmem, size = 0x1000, scoped, tag = 'scratch operand']
  %s0 = inlined_call_operand.hbm [shape: f32[16,128], index: 0, kind: input, shape index: {}]
  %s1 = inlined_call_operand.hbm [shape: f32[16,128], index: 1, kind: input, shape index: {}]
  %s2 = inlined_call_operand.hbm [shape: f32[1,8,128], index: 2, kind: output, shape index: {}]
  %s3 = sld [smem:[#allocation0]]
  $region38: #{tpu_custom_call.1} parent=0
    _
  %s5 = ssub.s32 1, %s3
  %s6 = scalar_select 0, %s5, %s3
  $region1: #{tpu_custom_call.1} parent=0
    #allocation3 [shape = 'u8[8192]{0}', space=vmem, size = 0x2000, scoped, tag = 'input window, operand 0, single buffered']
    #allocation4 [shape = 's32[1]{0}', space=sflag, size = 0x4, scoped, tag = 'scoped memory for tpu_custom_call.1']
    #allocation5 [shape = 's32[1]{0}', space=sflag, size = 0x4, scoped, tag = 'scoped memory for tpu_custom_call.1']
    #allocation6 [shape = 'u8[8192]{0}', space=vmem, size = 0x2000, scoped, tag = 'input window, operand 1, single buffered']
    #allocation7 [shape = 's32[1]{0}', space=sflag, size = 0x4, scoped, tag = 'scoped memory for tpu_custom_call.1']
    #allocation8 [shape = 'u8[4096]{0}', space=vmem, size = 0x1000, scoped, tag = 'output window, operand 0, single buffered']
    %7 = vsyncpa [#allocation4], 0
    %8 = vsyncpa [#allocation7], 0
    %9 = vsyncpa [#allocation5], 0
    // Predicated region
    $region2: #{tpu_custom_call.1} parent=1 // pred_check
      _
    $region3: #{tpu_custom_call.1} parent=1 // pred_check_branch
      %11 = sbr.rel (0) target = $region5
    $region4: #{tpu_custom_call.1} parent=1 // pred_region
      %s12 = sadd.s32 0, 0
      %p13 = scmp.lt.s32.totalorder %s12, 0
      %s14 = scalar_select %p13, %s12, 0
      %s15 = smul.u32 2, %s14
      %s17 = ssub.s32 256, 256
      %18 = vsyncadd [#allocation4], %s17
      %s19 = smul.addr %s15, 128
      %s20 = scalar_lea.hbm %s0, %s19
      %s21 = sshll.u32 [#allocation3], 4
      %s22 = int_to_ptr.vmem [resolvable:$true] %s21
      %27 = dma.hbm_to_vmem [thread:$0]  %s20, 256, %s22, [#allocation4], 128, 128, 8
    $region5: #{tpu_custom_call.1} parent=1 // pred_fallthru
      _
    // Predicated region
    $region6: #{tpu_custom_call.1} parent=1 // pred_check
      _
    $region7: #{tpu_custom_call.1} parent=1 // pred_check_branch
      %29 = sbr.rel (0) target = $region9
    $region8: #{tpu_custom_call.1} parent=1 // pred_region
      %s30 = sadd.s32 0, 0
      %p31 = scmp.lt.s32.totalorder %s30, 0
      %s32 = scalar_select %p31, %s30, 0
      %s33 = smul.u32 2, %s32
      %s35 = ssub.s32 256, 256
      %36 = vsyncadd [#allocation7], %s35
      %s37 = smul.addr %s33, 128
      %s38 = scalar_lea.hbm %s1, %s37
      %s39 = sshll.u32 [#allocation6], 4
      %s40 = int_to_ptr.vmem [resolvable:$true] %s39
      %45 = dma.hbm_to_vmem [thread:$0]  %s38, 256, %s40, [#allocation7], 128, 128, 8
    $region9: #{tpu_custom_call.1} parent=1 // pred_fallthru
      _
    // Predicated region
    $region10: #{tpu_custom_call.1} parent=1 // pred_check
      _
    $region11: #{tpu_custom_call.1} parent=1 // pred_check_branch
      %47 = sbr.rel (0) target = $region13
    $region12: #{tpu_custom_call.1} parent=1 // pred_region
      %48 = dma.done [#allocation4], 256
    $region13: #{tpu_custom_call.1} parent=1 // pred_fallthru
      _
    // Predicated region
    $region14: #{tpu_custom_call.1} parent=1 // pred_check
      _
    $region15: #{tpu_custom_call.1} parent=1 // pred_check_branch
      %50 = sbr.rel (0) target = $region17
    $region16: #{tpu_custom_call.1} parent=1 // pred_region
      %51 = dma.done [#allocation7], 256
    $region17: #{tpu_custom_call.1} parent=1 // pred_fallthru
      _
    %s52 = sadd.s32 0, 0
    %p53 = scmp.lt.s32.totalorder %s52, 0
    %s54 = scalar_select %p53, %s52, 0
    %s55 = smul.u32 2, %s54
    %s56 = sadd.s32 0, 0
    %p57 = scmp.lt.s32.totalorder %s56, 0
    %s58 = scalar_select %p57, %s56, 0
    %s59 = smul.u32 2, %s58
    %s60 = sadd.s32 0, 0
    %p61 = scmp.eq.s32.totalorder 0, 0
    // Predicated region
    $region18: #{tpu_custom_call.1} parent=1 // pred_check
      %p62 = pneg %p61
    $region19: #{tpu_custom_call.1} parent=1 // pred_check_branch
      %64 = sbr.rel (%p62) target = $region21
    $region20: #{tpu_custom_call.1} parent=1 // pred_region
      %65 = vst [vmem:[#allocation2] sm:$0xff] 0.0
    $region21: #{tpu_custom_call.1} parent=1 // pred_fallthru
      _
    %p66 = scmp.lt.s32.totalorder %s60, 1
    // Predicated region
    $region22: #{tpu_custom_call.1} parent=1 // pred_check
      %p67 = pneg %p66
    $region23: #{tpu_custom_call.1} parent=1 // pred_check_branch
      %69 = sbr.rel (%p67) target = $region25
    $region24: #{tpu_custom_call.1} parent=1 // pred_region
      %v70 = vld [vmem:[#allocation3] sm:$0xff]
      %v71 = vld [vmem:[#allocation3 + $0x8] sm:$0xff]
      %v72 = vld [vmem:[#allocation6] sm:$0xff]
      %v73 = vld [vmem:[#allocation6 + $0x8] sm:$0xff]
      %v74 = vsub.f32 %v70, %v72
      %v75 = vsub.f32 %v71, %v73
      %v76 = vmul.f32 %v74, %v74
      %v77 = vmul.f32 %v75, %v75
      %v78 = vadd.f32 %v76, %v77
      %v79 = vld [vmem:[#allocation2] sm:$0xff]
      %v80 = vadd.f32 %v79, %v78
      %81 = vst [vmem:[#allocation2] sm:$0xff] %v80
    $region25: #{tpu_custom_call.1} parent=1 // pred_fallthru
      _
    // Predicated region
    $region26: #{tpu_custom_call.1} parent=1 // pred_check
      %p82 = pneg %p61
    $region27: #{tpu_custom_call.1} parent=1 // pred_check_branch
      %84 = sbr.rel (%p82) target = $region29
    $region28: #{tpu_custom_call.1} parent=1 // pred_region
      %v85 = vld [vmem:[#allocation2] sm:$0xff]
      %86 = vst [vmem:[#allocation8] sm:$0xff] %v85
    $region29: #{tpu_custom_call.1} parent=1 // pred_fallthru
      _
    // Predicated region
    $region30: #{tpu_custom_call.1} parent=1 // pred_check
      _
    $region31: #{tpu_custom_call.1} parent=1 // pred_check_branch
      %88 = sbr.rel (0) target = $region33
    $region32: #{tpu_custom_call.1} parent=1 // pred_region
      %s90 = ssub.s32 128, 128
      %91 = vsyncadd [#allocation5], %s90
      %s93 = sshll.u32 [#allocation8], 4
      %s94 = int_to_ptr.vmem [resolvable:$true] %s93
      %96 = dma.vmem_to_hbm [thread:$0]  %s94, 128, %s2, [#allocation5]
    $region33: #{tpu_custom_call.1} parent=1 // pred_fallthru
      _
    // Predicated region
    $region34: #{tpu_custom_call.1} parent=1 // pred_check
      _
    $region35: #{tpu_custom_call.1} parent=1 // pred_check_branch
      %98 = sbr.rel (0) target = $region37
    $region36: #{tpu_custom_call.1} parent=1 // pred_region
      %99 = dma.done [#allocation5], 128
    $region37: #{tpu_custom_call.1} parent=1 // pred_fallthru
      _
    %100 = vsyncpa [#allocation4], 1
    %101 = vsyncpa [#allocation7], 1
    %102 = vsyncpa [#allocation5], 1

</llo_original>
